<compile_context>
chip_gen: v7x
topology: tpu7x:2x2x1
jax: 0.10.0
libtpu: 0.0.40
codegen_flags: <defaults>
</compile_context>

<pallas_src>
import functools

import jax
import jax.numpy as jnp
from jax import lax
from jax.experimental import pallas as pl
from jax.experimental.pallas import tpu as pltpu


def _mixed_pool_kernel(alpha_ref, x_ref, o_ref, *, k, s):
    """alpha_ref: SMEM (1,) learnable mixing scalar.
    x_ref:  VMEM (tHi, W, tNC) input tile (tHi = tHo*s when k == s, else H).
    o_ref:  VMEM (tHo, Wo, tNC) output tile.
    Computes alpha * maxpool + ((1-alpha)/k^2) * sumpool over k x k windows,
    stride s, padding=0, dilation=1.
    """
    tHo, Wo, _ = o_ref.shape
    alpha = alpha_ref[0].astype(jnp.float32)
    # Fold the two scalar factors: out = alpha*max + c_avg*sum (one fewer vmul).
    c_avg = (1.0 - alpha) * (1.0 / float(k * k))

    mx = None
    sm = None
    # Static unrolled loop over the k*k window offsets.  Each offset is a
    # strided ref load (strides only on the leading H / sublane W axes, lane
    # axis stays dense), so only O(tHo*Wo*tNC) f32 values live in vregs.
    for i in range(k):
        for j in range(k):
            p = x_ref[pl.ds(i, tHo, stride=s), pl.ds(j, Wo, stride=s), :]
            p = p.astype(jnp.float32)          # accumulate in f32 (bf16-safe)
            if mx is None:
                mx = p
                sm = p
            else:
                mx = jnp.maximum(mx, p)
                sm = sm + p

    # Single store per tile (keeps the v5e single vector-store slot happy).
    o_ref[...] = (alpha * mx + c_avg * sm).astype(o_ref.dtype)


def mixed_pool_hwnc(x_hwnc, alpha, kernel_size, stride, padding=0, dilation=1):
    """Channels-last fast path. x_hwnc: (H, W, NC) -> (Ho, Wo, NC)."""
    # TODO(synk): padding > 0 / dilation > 1 paths of F.max_pool2d / F.avg_pool2d
    # are not implemented (the module defaults are padding=0, dilation=1).
    assert padding == 0 and dilation == 1

    H, W, NC = x_hwnc.shape
    k, s = int(kernel_size), int(stride)
    Ho = (H - k) // s + 1
    Wo = (W - k) // s + 1
    dtype = x_hwnc.dtype
    itemsize = jnp.dtype(dtype).itemsize

    # Lane blocking: keep the NC (lane) dim dense.  Pad to a 128-multiple only
    # when NC >= 128 (padding a tiny NC would multiply real HBM traffic).
    if NC >= 128:
        NCp = ((NC + 127) // 128) * 128
        tNC = next(t for t in (512, 256, 128) if NCp % t == 0)
    else:
        NCp = NC
        tNC = NC  # full-dim lane block (allowed by the (8,128) rule)
    if NCp != NC:
        x_hwnc = jnp.pad(x_hwnc, ((0, 0), (0, 0), (0, NCp - NC)))

    # Output-row blocking.  Non-overlapping windows (k == s) tile cleanly with
    # block-index maps (no halo re-fetch): input block i covers rows
    # [i*tHo*s, (i+1)*tHo*s).
    if k == s:
        budget = 4 * 1024 * 1024  # ~4 MiB input tile; ~10 MiB double-buffered
        tHo = 1
        for t in range(1, Ho + 1):
            if Ho % t == 0 and t * s * W * tNC * itemsize <= budget:
                tHo = t
        tHi = tHo * s
    else:
        # TODO(synk): overlapping windows (k != s) are not Ho-tiled (would need
        # halo blocks); fall back to the full H extent per grid step.
        tHo, tHi = Ho, H

    grid = (NCp // tNC, Ho // tHo)
    alpha_arr = jnp.asarray([alpha], dtype=jnp.float32)

    out = pl.pallas_call(
        functools.partial(_mixed_pool_kernel, k=k, s=s),
        out_shape=jax.ShapeDtypeStruct((Ho, Wo, NCp), dtype),
        grid_spec=pltpu.PrefetchScalarGridSpec(
            num_scalar_prefetch=0,
            grid=grid,
            in_specs=[
                pl.BlockSpec(memory_space=pltpu.MemorySpace.SMEM),       # alpha
                pl.BlockSpec((tHi, W, tNC), lambda c, i: (i, 0, c)),     # x tile
            ],
            out_specs=pl.BlockSpec((tHo, Wo, tNC), lambda c, i: (i, 0, c)),
        ),
        compiler_params=pltpu.CompilerParams(
            dimension_semantics=("parallel", "parallel"),
            vmem_limit_bytes=48 * 1024 * 1024,
        ),
    )(alpha_arr, x_hwnc)

    if NCp != NC:
        out = out[:, :, :NC]
    return out


def mixed_pool(x, alpha, kernel_size, stride, padding=0, dilation=1):
    """x: (N, C, H, W) -> (N, C, Ho, Wo).  Matches mixedPool.forward."""
    N, C, H, W = x.shape
    # NOTE: the NCHW <-> (H, W, N*C) transposes are model-boundary layout glue;
    # a channels-last model should call mixed_pool_hwnc directly and skip them.
    xt = jnp.transpose(x, (2, 3, 0, 1)).reshape(H, W, N * C)
    out = mixed_pool_hwnc(xt, alpha, kernel_size, stride, padding, dilation)
    Ho, Wo, _ = out.shape
    return jnp.transpose(out.reshape(Ho, Wo, N, C), (2, 3, 0, 1))


def _reference_mixed_pool(x, alpha, k, s):
    """Pure-JAX reference (matches F.max_pool2d / F.avg_pool2d, padding=0)."""
    mx = lax.reduce_window(
        x, -jnp.inf, lax.max, (1, 1, k, k), (1, 1, s, s), "VALID"
    )
    av = lax.reduce_window(
        x, 0.0, lax.add, (1, 1, k, k), (1, 1, s, s), "VALID"
    ) / float(k * k)
    return alpha * mx + (1.0 - alpha) * av


if __name__ == "__main__":
    key = jax.random.PRNGKey(0)

    # Deterministic "parameter" init (nn.Parameter(FloatTensor([alpha]))).
    alpha = 0.6
    kernel_size = 2
    stride = 2

    # Small input consistent with an MNIST-style conv feature map, NCHW.
    x = jax.random.normal(key, (2, 4, 16, 16), dtype=jnp.float32)

    out = mixed_pool(x, alpha, kernel_size, stride)
    out = jax.block_until_ready(out)

    ref = _reference_mixed_pool(x, alpha, kernel_size, stride)
    assert out.shape == (2, 4, 8, 8), out.shape
    assert jnp.allclose(out, ref, atol=1e-5, rtol=1e-5), "mismatch vs reference"

    print("KERNEL_OK")
</pallas_src>

<mosaic_0001>
module attributes {stable_mosaic.version = 11 : i64} {
  func.func @_mixed_pool_kernel(%arg0: i32, %arg1: i32, %arg2: memref<1xf32, #tpu.memory_space<smem>>, %arg3: memref<16x16x8xf32, #tpu.memory_space<vmem>>, %arg4: memref<8x8x8xf32, #tpu.memory_space<vmem>>) attributes {dimension_semantics = [#tpu.dimension_semantics<parallel>, #tpu.dimension_semantics<parallel>], iteration_bounds = array<i64: 1, 1>, scalar_prefetch = 0 : i64, scratch_operands = 0 : i64, tpu.core_type = #tpu.core_type<tc>, window_params = [{transform_indices = @transform_0, window_bounds = array<i64: 1>}, {transform_indices = @transform_1, window_bounds = array<i64: 16, 16, 8>}, {transform_indices = @transform_2, window_bounds = array<i64: 8, 8, 8>}]} {
    %c0 = arith.constant 0 : index
    %0 = memref.load %arg2[%c0] : memref<1xf32, #tpu.memory_space<smem>>
    %cst = arith.constant 1.000000e+00 : f32
    %1 = arith.subf %cst, %0 : f32
    %cst_0 = arith.constant 2.500000e-01 : f32
    %2 = arith.mulf %1, %cst_0 : f32
    %c0_1 = arith.constant 0 : index
    %c0_2 = arith.constant 0 : index
    %c0_3 = arith.constant 0 : index
    %3 = tpu.strided_load %arg3[%c0_1, %c0_2, %c0_3] {strides = array<i32: 2, 2, 1>} : memref<16x16x8xf32, #tpu.memory_space<vmem>>, vector<8x8x8xf32>
    %c0_4 = arith.constant 0 : index
    %c1 = arith.constant 1 : index
    %c0_5 = arith.constant 0 : index
    %4 = tpu.strided_load %arg3[%c0_4, %c1, %c0_5] {strides = array<i32: 2, 2, 1>} : memref<16x16x8xf32, #tpu.memory_space<vmem>>, vector<8x8x8xf32>
    %5 = arith.maximumf %3, %4 : vector<8x8x8xf32>
    %6 = arith.addf %3, %4 : vector<8x8x8xf32>
    %c1_6 = arith.constant 1 : index
    %c0_7 = arith.constant 0 : index
    %c0_8 = arith.constant 0 : index
    %7 = tpu.strided_load %arg3[%c1_6, %c0_7, %c0_8] {strides = array<i32: 2, 2, 1>} : memref<16x16x8xf32, #tpu.memory_space<vmem>>, vector<8x8x8xf32>
    %8 = arith.maximumf %5, %7 : vector<8x8x8xf32>
    %9 = arith.addf %6, %7 : vector<8x8x8xf32>
    %c1_9 = arith.constant 1 : index
    %c1_10 = arith.constant 1 : index
    %c0_11 = arith.constant 0 : index
    %10 = tpu.strided_load %arg3[%c1_9, %c1_10, %c0_11] {strides = array<i32: 2, 2, 1>} : memref<16x16x8xf32, #tpu.memory_space<vmem>>, vector<8x8x8xf32>
    %11 = arith.maximumf %8, %10 : vector<8x8x8xf32>
    %12 = arith.addf %9, %10 : vector<8x8x8xf32>
    %13 = vector.broadcast %0 : f32 to vector<8x8x8xf32>
    %14 = arith.mulf %13, %11 : vector<8x8x8xf32>
    %15 = vector.broadcast %2 : f32 to vector<8x8x8xf32>
    %16 = arith.mulf %15, %12 : vector<8x8x8xf32>
    %17 = arith.addf %14, %16 : vector<8x8x8xf32>
    %c0_12 = arith.constant 0 : index
    %c0_13 = arith.constant 0 : index
    %c0_14 = arith.constant 0 : index
    %18 = vector.load %arg4[%c0_12, %c0_13, %c0_14] : memref<8x8x8xf32, #tpu.memory_space<vmem>>, vector<8x8x8xf32>
    tpu.vector_store %arg4[%c0_12, %c0_13, %c0_14], %17 {strides = array<i32>} : memref<8x8x8xf32, #tpu.memory_space<vmem>>, vector<8x8x8xf32>,
    return
  }
  func.func @transform_0(%arg0: i32, %arg1: i32) -> i32 {
    %c0_i32 = arith.constant 0 : i32
    %c0_i32_0 = arith.constant 0 : i32
    return %c0_i32 : i32
  }
  func.func @transform_1(%arg0: i32, %arg1: i32) -> (i32, i32, i32) {
    %c0_i32 = arith.constant 0 : i32
    %c0_i32_0 = arith.constant 0 : i32
    return %arg1, %c0_i32, %arg0 : i32, i32, i32
  }
  func.func @transform_2(%arg0: i32, %arg1: i32) -> (i32, i32, i32) {
    %c0_i32 = arith.constant 0 : i32
    %c0_i32_0 = arith.constant 0 : i32
    return %arg1, %c0_i32, %arg0 : i32, i32, i32
  }
}

</mosaic_0001>

<llo_original>
// kernel: tpu_custom_call.1
$region0: #{tpu_custom_call.1}
  #allocation0 [shape = 'u32[]', space=smem, size = 0x4, offset = 0x4, fixed_abs, tag = 'smem constant byte address 0x4 - core index']
  #allocation1 [shape = 'u32[144,128]{1,0:T(1,128)}', space=vmem, size = 0x12000, scoped, tag = 'internal scratch']
  #allocation2 [shape = 'f32[1]{0:T(128)S(6)}', space=smem, size = 0x200, scoped, tag = 'scoped memory for tpu_custom_call.1']
  %s0 = inlined_call_operand.<no memory space> [shape: f32[1], index: 0, kind: input, shape index: {}]
  %s1 = inlined_call_operand.vmem [shape: f32[16,16,8], index: 1, kind: input, shape index: {}]
  %s2 = inlined_call_operand.hbm [shape: f32[8,8,8], index: 2, kind: output, shape index: {}]
  %s3 = sld [smem:[#allocation0]]
  $region18: #{tpu_custom_call.1} parent=0
    _
  %s5 = ssub.s32 1, %s3
  %s6 = scalar_select 0, %s5, %s3
  %7 = sst [smem:[#allocation2]] %s0
  $region1: #{tpu_custom_call.1} parent=0
    #allocation3 [shape = 'u8[32768]{0}', space=vmem, size = 0x8000, scoped, tag = 'output window, operand 0, single buffered']
    #allocation4 [shape = 's32[1]{0}', space=sflag, size = 0x4, scoped, tag = 'scoped memory for tpu_custom_call.1']
    %8 = vsyncpa [#allocation4], 0
    // Predicated region
    $region2: #{tpu_custom_call.1} parent=1 // pred_check
      _
    $region3: #{tpu_custom_call.1} parent=1 // pred_check_branch
      %10 = sbr.rel (0) target = $region5
    $region4: #{tpu_custom_call.1} parent=1 // pred_region
      _
    $region5: #{tpu_custom_call.1} parent=1 // pred_fallthru
      _
    // Predicated region
    $region6: #{tpu_custom_call.1} parent=1 // pred_check
      _
    $region7: #{tpu_custom_call.1} parent=1 // pred_check_branch
      %12 = sbr.rel (0) target = $region9
    $region8: #{tpu_custom_call.1} parent=1 // pred_region
      _
    $region9: #{tpu_custom_call.1} parent=1 // pred_fallthru
      _
    %s13 = sld [smem:[#allocation2]]
    %s14 = ssub.f32 1.0, %s13
    %s15 = smul.f32 %s14, 0.25
    %v16 = vld [vmem:[%s1] ss:$2 sm:$0xff]
    %s17 = scalar_lea.vmem %s1, 32
    %v18 = vld [vmem:[%s17] ss:$2 sm:$0xff]
    %s19 = scalar_lea.vmem %s1, 64
    %v20 = vld [vmem:[%s19] ss:$2 sm:$0xff]
    %s21 = scalar_lea.vmem %s1, 96
    %v22 = vld [vmem:[%s21] ss:$2 sm:$0xff]
    %s23 = scalar_lea.vmem %s1, 128
    %v24 = vld [vmem:[%s23] ss:$2 sm:$0xff]
    %s25 = scalar_lea.vmem %s1, 160
    %v26 = vld [vmem:[%s25] ss:$2 sm:$0xff]
    %s27 = scalar_lea.vmem %s1, 192
    %v28 = vld [vmem:[%s27] ss:$2 sm:$0xff]
    %s29 = scalar_lea.vmem %s1, 224
    %v30 = vld [vmem:[%s29] ss:$2 sm:$0xff]
    %s31 = scalar_lea.vmem %s1, 1
    %v32 = vld [vmem:[%s31] ss:$2 sm:$0xff]
    %s33 = scalar_lea.vmem %s1, 33
    %v34 = vld [vmem:[%s33] ss:$2 sm:$0xff]
    %s35 = scalar_lea.vmem %s1, 65
    %v36 = vld [vmem:[%s35] ss:$2 sm:$0xff]
    %s37 = scalar_lea.vmem %s1, 97
    %v38 = vld [vmem:[%s37] ss:$2 sm:$0xff]
    %s39 = scalar_lea.vmem %s1, 129
    %v40 = vld [vmem:[%s39] ss:$2 sm:$0xff]
    %s41 = scalar_lea.vmem %s1, 161
    %v42 = vld [vmem:[%s41] ss:$2 sm:$0xff]
    %s43 = scalar_lea.vmem %s1, 193
    %v44 = vld [vmem:[%s43] ss:$2 sm:$0xff]
    %s45 = scalar_lea.vmem %s1, 225
    %v46 = vld [vmem:[%s45] ss:$2 sm:$0xff]
    %v47 = vmax.f32 %v16, %v32
    %v48 = vmax.f32 %v18, %v34
    %v49 = vmax.f32 %v20, %v36
    %v50 = vmax.f32 %v22, %v38
    %v51 = vmax.f32 %v24, %v40
    %v52 = vmax.f32 %v26, %v42
    %v53 = vmax.f32 %v28, %v44
    %v54 = vmax.f32 %v30, %v46
    %v55 = vadd.f32 %v16, %v32
    %v56 = vadd.f32 %v18, %v34
    %v57 = vadd.f32 %v20, %v36
    %v58 = vadd.f32 %v22, %v38
    %v59 = vadd.f32 %v24, %v40
    %v60 = vadd.f32 %v26, %v42
    %v61 = vadd.f32 %v28, %v44
    %v62 = vadd.f32 %v30, %v46
    %s63 = scalar_lea.vmem %s1, 16
    %v64 = vld [vmem:[%s63] ss:$2 sm:$0xff]
    %s65 = scalar_lea.vmem %s63, 32
    %v66 = vld [vmem:[%s65] ss:$2 sm:$0xff]
    %s67 = scalar_lea.vmem %s63, 64
    %v68 = vld [vmem:[%s67] ss:$2 sm:$0xff]
    %s69 = scalar_lea.vmem %s63, 96
    %v70 = vld [vmem:[%s69] ss:$2 sm:$0xff]
    %s71 = scalar_lea.vmem %s63, 128
    %v72 = vld [vmem:[%s71] ss:$2 sm:$0xff]
    %s73 = scalar_lea.vmem %s63, 160
    %v74 = vld [vmem:[%s73] ss:$2 sm:$0xff]
    %s75 = scalar_lea.vmem %s63, 192
    %v76 = vld [vmem:[%s75] ss:$2 sm:$0xff]
    %s77 = scalar_lea.vmem %s63, 224
    %v78 = vld [vmem:[%s77] ss:$2 sm:$0xff]
    %v79 = vmax.f32 %v47, %v64
    %v80 = vmax.f32 %v48, %v66
    %v81 = vmax.f32 %v49, %v68
    %v82 = vmax.f32 %v50, %v70
    %v83 = vmax.f32 %v51, %v72
    %v84 = vmax.f32 %v52, %v74
    %v85 = vmax.f32 %v53, %v76
    %v86 = vmax.f32 %v54, %v78
    %v87 = vadd.f32 %v55, %v64
    %v88 = vadd.f32 %v56, %v66
    %v89 = vadd.f32 %v57, %v68
    %v90 = vadd.f32 %v58, %v70
    %v91 = vadd.f32 %v59, %v72
    %v92 = vadd.f32 %v60, %v74
    %v93 = vadd.f32 %v61, %v76
    %v94 = vadd.f32 %v62, %v78
    %s95 = scalar_lea.vmem %s63, 1
    %v96 = vld [vmem:[%s95] ss:$2 sm:$0xff]
    %s97 = scalar_lea.vmem %s63, 33
    %v98 = vld [vmem:[%s97] ss:$2 sm:$0xff]
    %s99 = scalar_lea.vmem %s63, 65
    %v100 = vld [vmem:[%s99] ss:$2 sm:$0xff]
    %s101 = scalar_lea.vmem %s63, 97
    %v102 = vld [vmem:[%s101] ss:$2 sm:$0xff]
    %s103 = scalar_lea.vmem %s63, 129
    %v104 = vld [vmem:[%s103] ss:$2 sm:$0xff]
    %s105 = scalar_lea.vmem %s63, 161
    %v106 = vld [vmem:[%s105] ss:$2 sm:$0xff]
    %s107 = scalar_lea.vmem %s63, 193
    %v108 = vld [vmem:[%s107] ss:$2 sm:$0xff]
    %s109 = scalar_lea.vmem %s63, 225
    %v110 = vld [vmem:[%s109] ss:$2 sm:$0xff]
    %v111 = vmax.f32 %v79, %v96
    %v112 = vmax.f32 %v80, %v98
    %v113 = vmax.f32 %v81, %v100
    %v114 = vmax.f32 %v82, %v102
    %v115 = vmax.f32 %v83, %v104
    %v116 = vmax.f32 %v84, %v106
    %v117 = vmax.f32 %v85, %v108
    %v118 = vmax.f32 %v86, %v110
    %v119 = vadd.f32 %v87, %v96
    %v120 = vadd.f32 %v88, %v98
    %v121 = vadd.f32 %v89, %v100
    %v122 = vadd.f32 %v90, %v102
    %v123 = vadd.f32 %v91, %v104
    %v124 = vadd.f32 %v92, %v106
    %v125 = vadd.f32 %v93, %v108
    %v126 = vadd.f32 %v94, %v110
    %v127 = vstv %s13
    %v128 = vmul.f32 %v127, %v111
    %v129 = vmul.f32 %v127, %v112
    %v130 = vmul.f32 %v127, %v113
    %v131 = vmul.f32 %v127, %v114
    %v132 = vmul.f32 %v127, %v115
    %v133 = vmul.f32 %v127, %v116
    %v134 = vmul.f32 %v127, %v117
    %v135 = vmul.f32 %v127, %v118
    %v136 = vstv %s15
    %v137 = vmul.f32 %v136, %v119
    %v138 = vmul.f32 %v136, %v120
    %v139 = vmul.f32 %v136, %v121
    %v140 = vmul.f32 %v136, %v122
    %v141 = vmul.f32 %v136, %v123
    %v142 = vmul.f32 %v136, %v124
    %v143 = vmul.f32 %v136, %v125
    %v144 = vmul.f32 %v136, %v126
    %v145 = vadd.f32 %v128, %v137
    %v146 = vadd.f32 %v129, %v138
    %v147 = vadd.f32 %v130, %v139
    %v148 = vadd.f32 %v131, %v140
    %v149 = vadd.f32 %v132, %v141
    %v150 = vadd.f32 %v133, %v142
    %v151 = vadd.f32 %v134, %v143
    %v152 = vadd.f32 %v135, %v144
    %vm153 = vcmask 64512
    %154 = vst.msk [vmem:[#allocation3] sm:$0xff] %vm153, %v145
    %155 = vst.msk [vmem:[#allocation3 + $0x8] sm:$0xff] %vm153, %v146
    %156 = vst.msk [vmem:[#allocation3 + $0x10] sm:$0xff] %vm153, %v147
    %157 = vst.msk [vmem:[#allocation3 + $0x18] sm:$0xff] %vm153, %v148
    %158 = vst.msk [vmem:[#allocation3 + $0x20] sm:$0xff] %vm153, %v149
    %159 = vst.msk [vmem:[#allocation3 + $0x28] sm:$0xff] %vm153, %v150
    %160 = vst.msk [vmem:[#allocation3 + $0x30] sm:$0xff] %vm153, %v151
    %161 = vst.msk [vmem:[#allocation3 + $0x38] sm:$0xff] %vm153, %v152
    // Predicated region
    $region10: #{tpu_custom_call.1} parent=1 // pred_check
      _
    $region11: #{tpu_custom_call.1} parent=1 // pred_check_branch
      %163 = sbr.rel (0) target = $region13
    $region12: #{tpu_custom_call.1} parent=1 // pred_region
      %s165 = ssub.s32 1024, 1024
      %166 = vsyncadd [#allocation4], %s165
      %s167 = sshll.u32 [#allocation3], 4
      %s168 = int_to_ptr.vmem [resolvable:$true] %s167
      %173 = dma.vmem_to_hbm [thread:$0]  %s168, 1024, %s2, [#allocation4], 128, 128, 8
    $region13: #{tpu_custom_call.1} parent=1 // pred_fallthru
      _
    // Predicated region
    $region14: #{tpu_custom_call.1} parent=1 // pred_check
      _
    $region15: #{tpu_custom_call.1} parent=1 // pred_check_branch
      %175 = sbr.rel (0) target = $region17
    $region16: #{tpu_custom_call.1} parent=1 // pred_region
      %176 = dma.done [#allocation4], 1024
    $region17: #{tpu_custom_call.1} parent=1 // pred_fallthru
      _
    %177 = vsyncpa [#allocation4], 1

</llo_original>
